<compile_context>
chip_gen: v7x
topology: tpu7x:2x2x1
jax: 0.10.0
libtpu: 0.0.40
codegen_flags: <defaults>
</compile_context>

<pallas_src>
import functools

import jax
import jax.numpy as jnp
from jax.experimental import pallas as pl
from jax.experimental.pallas import tpu as pltpu


# ----------------------------- kernels --------------------------------------


def _conv1_kernel(a_ref, xw1_ref, w2_ref, b1_ref, g_ref, acc_ref, *, tk):
    """Layer 1 + fused transform: g = relu(sum_k A[i,k] @ XW1[k] + b1) @ W2.

    XW1 is VMEM-resident (constant index_map); only A is streamed in (tm, tk)
    tiles.  All matmuls use bf16 operands with f32 MXU accumulation.
    """
    k = pl.program_id(1)

    @pl.when(k == 0)
    def _():
        acc_ref[...] = jnp.zeros_like(acc_ref)

    start = pl.multiple_of(k * tk, 128)
    partial = jnp.dot(a_ref[...], xw1_ref[pl.ds(start, tk), :],
                      preferred_element_type=jnp.float32)
    is_last = k == pl.num_programs(1) - 1

    @pl.when(jnp.logical_not(is_last))
    def _():
        acc_ref[...] += partial

    @pl.when(is_last)
    def _():
        # Fold the last partial product in locally (no store+reload of acc).
        h1 = jnp.maximum(acc_ref[...] + partial + b1_ref[...], 0.0)
        g_ref[...] = jnp.dot(h1.astype(jnp.bfloat16), w2_ref[...],
                             preferred_element_type=jnp.float32
                             ).astype(g_ref.dtype)


def _conv2_mean_kernel(a_ref, g_ref, b2_ref, o_ref, acc_ref, *, tm, tk, n_nodes):
    """Layer 2 + fused node mean.

    h2 = relu(sum_k A[i,k] @ g[k] + b2); each row tile writes its masked partial
    column-sum into a lane/sublane-dense (8, H_pad) output block.  No matmul in
    the finalize (W2 was already folded into g by layer 1).
    """
    i = pl.program_id(0)
    k = pl.program_id(1)

    @pl.when(k == 0)
    def _():
        acc_ref[...] = jnp.zeros_like(acc_ref)

    start = pl.multiple_of(k * tk, 128)
    partial = jnp.dot(a_ref[...], g_ref[pl.ds(start, tk), :],
                      preferred_element_type=jnp.float32)
    is_last = k == pl.num_programs(1) - 1

    @pl.when(jnp.logical_not(is_last))
    def _():
        acc_ref[...] += partial

    @pl.when(is_last)
    def _():
        h2 = jnp.maximum(acc_ref[...] + partial + b2_ref[...], 0.0)
        # NOTE: padded node rows come out as relu(b2) (non-zero) because the bias
        # is added to all-zero aggregated rows; this is harmless ONLY because
        # (a) A's padded columns are exactly zero (so padded rows of g never leak
        # into valid rows) and (b) we mask padded rows out of the mean here.
        row = jax.lax.broadcasted_iota(jnp.int32, h2.shape, 0) + i * tm
        h2 = jnp.where(row < n_nodes, h2, 0.0)
        psum = jnp.sum(h2, axis=0, keepdims=True)           # (1, H_pad) XLU reduce
        o_ref[...] = jnp.broadcast_to(psum, o_ref.shape)    # dense (8, H_pad) store


# ----------------------------- wrapper ---------------------------------------


def _round_up(x, m):
    return pl.cdiv(x, m) * m


def _pad2(x, rows, cols):
    r, c = x.shape
    return jnp.pad(x, ((0, rows - r), (0, cols - c)))


def _pick_tile(n_pad, cap, step):
    """Largest tile <= cap (stepping by `step`) that divides n_pad."""
    t = min(cap, n_pad)
    while n_pad % t:
        t -= step
    return t


def _pick_tiles(n_pad, tm_cap, tk_cap):
    tk = _pick_tile(n_pad, tk_cap, 128)       # K tile: multiple of 128 lanes
    tm = _pick_tile(n_pad, tm_cap, 8)         # row tile: multiple of 8 sublanes
    # Expose >= 2 row tiles when possible so the "parallel" axis can feed both
    # v7x TensorCores (no-op on single-TC v5e/v6e).
    if n_pad // tm < 2 and n_pad >= 256:
        tm = _pick_tile(n_pad, tm // 2, 8)
    return tm, tk


def gnn_forward(ahat, features, w1, b1, w2, b2, *, tm_cap=512, tk_cap=1024):
    """relu(A@X@W1+b1) -> relu(A@.@W2+b2) -> mean over nodes, via 2 Pallas passes."""
    n, _ = features.shape
    hidden = w1.shape[1]

    n_pad = _round_up(n, 128)
    h_pad = _round_up(hidden, 128)
    tm, tk = _pick_tiles(n_pad, tm_cap, tk_cap)
    nr = n_pad // tm
    nk = n_pad // tk

    # bf16 for every MXU operand; bias / epilogue stay f32.  Padded rows/cols of
    # A are exactly zero (required by the masking argument in the kernels).
    a_bf = _pad2(ahat, n_pad, n_pad).astype(jnp.bfloat16)

    # Tiny (N, in) @ (in, hidden) matmul done by XLA in the wrapper so the
    # in-kernel matmuls only ever see the hidden-sized feature operand.
    xw1_bf = _pad2(jnp.dot(features, w1), n_pad, h_pad).astype(jnp.bfloat16)
    w2_bf = _pad2(w2, h_pad, h_pad).astype(jnp.bfloat16)
    b1_p = _pad2(b1, 1, h_pad).astype(jnp.float32)
    b2_p = _pad2(b2, 1, h_pad).astype(jnp.float32)

    cparams = pltpu.CompilerParams(
        dimension_semantics=("parallel", "arbitrary"),
        # Under v7x's 64 MiB physical VMEM even with the resident operands.
        vmem_limit_bytes=48 * 1024 * 1024,
    )

    # ---- layer 1 (+ folded W2 transform): g = relu(A @ XW1 + b1) @ W2, bf16 ----
    g = pl.pallas_call(
        functools.partial(_conv1_kernel, tk=tk),
        out_shape=jax.ShapeDtypeStruct((n_pad, h_pad), jnp.bfloat16),
        grid=(nr, nk),
        in_specs=[
            pl.BlockSpec((tm, tk), lambda i, k: (i, k)),        # A tile (streamed)
            pl.BlockSpec((n_pad, h_pad), lambda i, k: (0, 0)),  # XW1 (VMEM-resident)
            pl.BlockSpec((h_pad, h_pad), lambda i, k: (0, 0)),  # W2 (resident)
            pl.BlockSpec((1, h_pad), lambda i, k: (0, 0)),      # b1
        ],
        out_specs=pl.BlockSpec((tm, h_pad), lambda i, k: (i, 0)),
        scratch_shapes=[pltpu.VMEM((tm, h_pad), jnp.float32)],
        compiler_params=cparams,
    )(a_bf, xw1_bf, w2_bf, b1_p)

    # ---- layer 2 + fused masked node-sum (no finalize matmul) -----------------
    psums = pl.pallas_call(
        functools.partial(_conv2_mean_kernel, tm=tm, tk=tk, n_nodes=n),
        out_shape=jax.ShapeDtypeStruct((nr * 8, h_pad), jnp.float32),
        grid=(nr, nk),
        in_specs=[
            pl.BlockSpec((tm, tk), lambda i, k: (i, k)),        # A tile (streamed)
            pl.BlockSpec((n_pad, h_pad), lambda i, k: (0, 0)),  # g (VMEM-resident)
            pl.BlockSpec((1, h_pad), lambda i, k: (0, 0)),      # b2
        ],
        out_specs=pl.BlockSpec((8, h_pad), lambda i, k: (i, 0)),
        scratch_shapes=[pltpu.VMEM((tm, h_pad), jnp.float32)],
        compiler_params=cparams,
    )(a_bf, g, b2_p)

    # Finalize: sum the per-row-tile partial sums, strip lane padding, /N.
    hg = psums.reshape(nr, 8, h_pad)[:, 0, :hidden].sum(axis=0, keepdims=True) / n
    return hg


# ----------------------------- test harness ----------------------------------


def build_normalized_adjacency(n, key):
    """Dense symmetric graph + DGL 'both' normalization D^-1/2 A D^-1/2."""
    src = jnp.arange(n)
    dst = (src + 1) % n
    adj = jnp.zeros((n, n), jnp.float32)
    adj = adj.at[src, dst].set(1.0)
    extra = jax.random.bernoulli(key, p=0.2, shape=(n, n)).astype(jnp.float32)
    extra = extra * (1.0 - jnp.eye(n, dtype=jnp.float32))
    adj = jnp.clip(adj + extra, 0.0, 1.0)
    adj = jnp.clip(adj + adj.T, 0.0, 1.0)
    deg = jnp.maximum(adj.sum(axis=1), 1.0)
    dinv = 1.0 / jnp.sqrt(deg)
    return dinv[:, None] * adj * dinv[None, :]


def ref_forward(ahat, features, w1, b1, w2, b2):
    """Pure-f32 JAX reference with the literal module semantics."""
    h1 = jnp.maximum(ahat @ features @ w1 + b1, 0.0)
    h2 = jnp.maximum(ahat @ h1 @ w2 + b2, 0.0)
    return jnp.mean(h2, axis=0, keepdims=True)


def _make_case(n, in_feats, hidden, key):
    k_feat, k_adj, k_w1, k_b1, k_w2, k_b2 = jax.random.split(key, 6)
    features = jax.random.normal(k_feat, (n, in_feats), jnp.float32)
    ahat = build_normalized_adjacency(n, k_adj)
    w1 = jax.random.normal(k_w1, (in_feats, hidden), jnp.float32) / jnp.sqrt(in_feats)
    b1 = 0.1 * jax.random.normal(k_b1, (1, hidden), jnp.float32)
    w2 = jax.random.normal(k_w2, (hidden, hidden), jnp.float32) / jnp.sqrt(hidden)
    b2 = 0.1 * jax.random.normal(k_b2, (1, hidden), jnp.float32)
    return ahat, features, w1, b1, w2, b2


if __name__ == "__main__":
    IN_FEATS, HIDDEN, NUM_CLASSES = 8, 32, 4

    key = jax.random.PRNGKey(0)
    k_a, k_b, k_wc = jax.random.split(key, 3)

    # classify Linear(hidden, num_classes): initialized but unused in forward().
    wc = jax.random.normal(k_wc, (HIDDEN, NUM_CLASSES), jnp.float32) / jnp.sqrt(HIDDEN)
    bc = jnp.zeros((NUM_CLASSES,), jnp.float32)
    del wc, bc

    gnn = jax.jit(gnn_forward, static_argnames=("tm_cap", "tk_cap"))

    # Case 1: tiny graph -> single tile after padding (N=16 -> 128).
    args1 = _make_case(16, IN_FEATS, HIDDEN, k_a)
    out1 = jax.block_until_ready(gnn(*args1))
    ref1 = ref_forward(*args1)
    assert out1.shape == (1, HIDDEN)
    assert jnp.allclose(out1, ref1, atol=2e-2, rtol=2e-2), (
        f"max abs diff {jnp.max(jnp.abs(out1 - ref1))}")

    # Case 2: multiple row tiles + padded-row masking (N=300 -> 384, nr=2).
    args2 = _make_case(300, IN_FEATS, HIDDEN, k_b)
    out2 = jax.block_until_ready(gnn(*args2))
    ref2 = ref_forward(*args2)
    assert out2.shape == (1, HIDDEN)
    assert jnp.allclose(out2, ref2, atol=2e-2, rtol=2e-2), (
        f"max abs diff {jnp.max(jnp.abs(out2 - ref2))}")

    # Case 3: same graph with small tile caps -> exercises the multi-step K
    # accumulation path (nk > 1) that big default tiles skip at this size.
    out3 = jax.block_until_ready(gnn(*args2, tm_cap=128, tk_cap=128))
    assert out3.shape == (1, HIDDEN)
    assert jnp.allclose(out3, ref2, atol=2e-2, rtol=2e-2), (
        f"max abs diff {jnp.max(jnp.abs(out3 - ref2))}")

    print("KERNEL_OK")
</pallas_src>

<mosaic_0001>
module attributes {stable_mosaic.version = 11 : i64} {
  func.func @_conv1_kernel(%arg0: i32, %arg1: i32, %arg2: memref<128x128xbf16, #tpu.memory_space<vmem>>, %arg3: memref<128x128xbf16, #tpu.memory_space<vmem>>, %arg4: memref<128x128xbf16, #tpu.memory_space<vmem>>, %arg5: memref<1x128xf32, #tpu.memory_space<vmem>>, %arg6: memref<128x128xbf16, #tpu.memory_space<vmem>>, %arg7: memref<128x128xf32, #tpu.memory_space<vmem>>) attributes {dimension_semantics = [#tpu.dimension_semantics<parallel>, #tpu.dimension_semantics<arbitrary>], iteration_bounds = array<i64: 1, 1>, scalar_prefetch = 0 : i64, scratch_operands = 1 : i64, tpu.core_type = #tpu.core_type<tc>, window_params = [{transform_indices = @transform_0, window_bounds = array<i64: 128, 128>}, {pipeline_mode = #tpu.pipeline_mode<synchronous>, transform_indices = @transform_1, window_bounds = array<i64: 128, 128>}, {pipeline_mode = #tpu.pipeline_mode<synchronous>, transform_indices = @transform_2, window_bounds = array<i64: 128, 128>}, {pipeline_mode = #tpu.pipeline_mode<synchronous>, transform_indices = @transform_3, window_bounds = array<i64: 1, 128>}, {transform_indices = @transform_4, window_bounds = array<i64: 128, 128>}]} {
    %c0_i32 = arith.constant 0 : i32
    %0 = arith.cmpi eq, %arg1, %c0_i32 : i32
    %1 = arith.extui %0 : i1 to i32
    %c0_i32_0 = arith.constant 0 : i32
    %2 = arith.cmpi ne, %1, %c0_i32_0 : i32
    scf.if %2 {
      %cst_6 = arith.constant 0.000000e+00 : f32
      %15 = vector.broadcast %cst_6 : f32 to vector<128x128xf32>
      %c0_7 = arith.constant 0 : index
      %c0_8 = arith.constant 0 : index
      %16 = vector.load %arg7[%c0_7, %c0_8] : memref<128x128xf32, #tpu.memory_space<vmem>>, vector<128x128xf32>
      tpu.vector_store %arg7[%c0_7, %c0_8], %15 {strides = array<i32>} : memref<128x128xf32, #tpu.memory_space<vmem>>, vector<128x128xf32>,
    } else {
    }
    %c128_i32 = arith.constant 128 : i32
    %3 = arith.muli %arg1, %c128_i32 : i32
    %4 = tpu.assume_multiple %3, 128 : i32
    %c0 = arith.constant 0 : index
    %c0_1 = arith.constant 0 : index
    %5 = vector.load %arg2[%c0, %c0_1] : memref<128x128xbf16, #tpu.memory_space<vmem>>, vector<128x128xbf16>
    %6 = arith.index_cast %4 : i32 to index
    %c0_2 = arith.constant 0 : index
    %7 = vector.load %arg3[%6, %c0_2] : memref<128x128xbf16, #tpu.memory_space<vmem>>, vector<128x128xbf16>
    %cst = arith.constant dense<0.000000e+00> : vector<128x128xf32>
    %8 = tpu.matmul %5, %7, %cst {dimension_numbers = #tpu.dot_dimension_numbers<[1], [0], [0], [1], [0, 0, 1, 1], [], []>} : vector<128x128xbf16>, vector<128x128xbf16>, vector<128x128xf32> -> vector<128x128xf32>
    %c0_i32_3 = arith.constant 0 : i32
    %9 = arith.cmpi eq, %arg1, %c0_i32_3 : i32
    %true = arith.constant true
    %10 = arith.xori %9, %true : i1
    %11 = arith.extui %10 : i1 to i32
    %c0_i32_4 = arith.constant 0 : i32
    %12 = arith.cmpi ne, %11, %c0_i32_4 : i32
    scf.if %12 {
      %c0_6 = arith.constant 0 : index
      %c0_7 = arith.constant 0 : index
      %15 = vector.load %arg7[%c0_6, %c0_7] : memref<128x128xf32, #tpu.memory_space<vmem>>, vector<128x128xf32>
      %16 = arith.addf %15, %8 : vector<128x128xf32>
      %c0_8 = arith.constant 0 : index
      %c0_9 = arith.constant 0 : index
      %17 = vector.load %arg7[%c0_8, %c0_9] : memref<128x128xf32, #tpu.memory_space<vmem>>, vector<128x128xf32>
      tpu.vector_store %arg7[%c0_8, %c0_9], %16 {strides = array<i32>} : memref<128x128xf32, #tpu.memory_space<vmem>>, vector<128x128xf32>,
    } else {
    }
    %13 = arith.extui %9 : i1 to i32
    %c0_i32_5 = arith.constant 0 : i32
    %14 = arith.cmpi ne, %13, %c0_i32_5 : i32
    scf.if %14 {
      %c0_6 = arith.constant 0 : index
      %c0_7 = arith.constant 0 : index
      %15 = vector.load %arg7[%c0_6, %c0_7] : memref<128x128xf32, #tpu.memory_space<vmem>>, vector<128x128xf32>
      %16 = arith.addf %15, %8 : vector<128x128xf32>
      %c0_8 = arith.constant 0 : index
      %c0_9 = arith.constant 0 : index
      %17 = vector.load %arg5[%c0_8, %c0_9] : memref<1x128xf32, #tpu.memory_space<vmem>>, vector<1x128xf32>
      %18 = vector.broadcast %17 : vector<1x128xf32> to vector<128x128xf32>
      %19 = arith.addf %16, %18 : vector<128x128xf32>
      %cst_10 = arith.constant 0.000000e+00 : f32
      %20 = vector.broadcast %cst_10 : f32 to vector<128x128xf32>
      %21 = arith.maximumf %19, %20 : vector<128x128xf32>
      %22 = arith.truncf %21 : vector<128x128xf32> to vector<128x128xbf16>
      %c0_11 = arith.constant 0 : index
      %c0_12 = arith.constant 0 : index
      %23 = vector.load %arg4[%c0_11, %c0_12] : memref<128x128xbf16, #tpu.memory_space<vmem>>, vector<128x128xbf16>
      %cst_13 = arith.constant dense<0.000000e+00> : vector<128x128xf32>
      %24 = tpu.matmul %22, %23, %cst_13 {dimension_numbers = #tpu.dot_dimension_numbers<[1], [0], [0], [1], [0, 0, 1, 1], [], []>} : vector<128x128xbf16>, vector<128x128xbf16>, vector<128x128xf32> -> vector<128x128xf32>
      %25 = arith.truncf %24 : vector<128x128xf32> to vector<128x128xbf16>
      %c0_14 = arith.constant 0 : index
      %c0_15 = arith.constant 0 : index
      %26 = vector.load %arg6[%c0_14, %c0_15] : memref<128x128xbf16, #tpu.memory_space<vmem>>, vector<128x128xbf16>
      tpu.vector_store %arg6[%c0_14, %c0_15], %25 {strides = array<i32>} : memref<128x128xbf16, #tpu.memory_space<vmem>>, vector<128x128xbf16>,
    } else {
    }
    return
  }
  func.func @transform_0(%arg0: i32, %arg1: i32) -> (i32, i32) {
    %c0_i32 = arith.constant 0 : i32
    return %arg0, %arg1 : i32, i32
  }
  func.func @transform_1(%arg0: i32, %arg1: i32) -> (i32, i32) {
    %c0_i32 = arith.constant 0 : i32
    %c0_i32_0 = arith.constant 0 : i32
    %c0_i32_1 = arith.constant 0 : i32
    return %c0_i32, %c0_i32_0 : i32, i32
  }
  func.func @transform_2(%arg0: i32, %arg1: i32) -> (i32, i32) {
    %c0_i32 = arith.constant 0 : i32
    %c0_i32_0 = arith.constant 0 : i32
    %c0_i32_1 = arith.constant 0 : i32
    return %c0_i32, %c0_i32_0 : i32, i32
  }
  func.func @transform_3(%arg0: i32, %arg1: i32) -> (i32, i32) {
    %c0_i32 = arith.constant 0 : i32
    %c0_i32_0 = arith.constant 0 : i32
    %c0_i32_1 = arith.constant 0 : i32
    return %c0_i32, %c0_i32_0 : i32, i32
  }
  func.func @transform_4(%arg0: i32, %arg1: i32) -> (i32, i32) {
    %c0_i32 = arith.constant 0 : i32
    %c0_i32_0 = arith.constant 0 : i32
    return %arg0, %c0_i32 : i32, i32
  }
}

module attributes {stable_mosaic.version = 11 : i64} {
  func.func @_conv2_mean_kernel(%arg0: i32, %arg1: i32, %arg2: memref<128x128xbf16, #tpu.memory_space<vmem>>, %arg3: memref<128x128xbf16, #tpu.memory_space<vmem>>, %arg4: memref<1x128xf32, #tpu.memory_space<vmem>>, %arg5: memref<8x128xf32, #tpu.memory_space<vmem>>, %arg6: memref<128x128xf32, #tpu.memory_space<vmem>>) attributes {dimension_semantics = [#tpu.dimension_semantics<parallel>, #tpu.dimension_semantics<arbitrary>], iteration_bounds = array<i64: 1, 1>, scalar_prefetch = 0 : i64, scratch_operands = 1 : i64, tpu.core_type = #tpu.core_type<tc>, window_params = [{transform_indices = @transform_0, window_bounds = array<i64: 128, 128>}, {pipeline_mode = #tpu.pipeline_mode<synchronous>, transform_indices = @transform_1, window_bounds = array<i64: 128, 128>}, {pipeline_mode = #tpu.pipeline_mode<synchronous>, transform_indices = @transform_2, window_bounds = array<i64: 1, 128>}, {transform_indices = @transform_3, window_bounds = array<i64: 8, 128>}]} {
    %c0_i32 = arith.constant 0 : i32
    %0 = arith.cmpi eq, %arg1, %c0_i32 : i32
    %1 = arith.extui %0 : i1 to i32
    %c0_i32_0 = arith.constant 0 : i32
    %2 = arith.cmpi ne, %1, %c0_i32_0 : i32
    scf.if %2 {
      %cst_6 = arith.constant 0.000000e+00 : f32
      %15 = vector.broadcast %cst_6 : f32 to vector<128x128xf32>
      %c0_7 = arith.constant 0 : index
      %c0_8 = arith.constant 0 : index
      %16 = vector.load %arg6[%c0_7, %c0_8] : memref<128x128xf32, #tpu.memory_space<vmem>>, vector<128x128xf32>
      tpu.vector_store %arg6[%c0_7, %c0_8], %15 {strides = array<i32>} : memref<128x128xf32, #tpu.memory_space<vmem>>, vector<128x128xf32>,
    } else {
    }
    %c128_i32 = arith.constant 128 : i32
    %3 = arith.muli %arg1, %c128_i32 : i32
    %4 = tpu.assume_multiple %3, 128 : i32
    %c0 = arith.constant 0 : index
    %c0_1 = arith.constant 0 : index
    %5 = vector.load %arg2[%c0, %c0_1] : memref<128x128xbf16, #tpu.memory_space<vmem>>, vector<128x128xbf16>
    %6 = arith.index_cast %4 : i32 to index
    %c0_2 = arith.constant 0 : index
    %7 = vector.load %arg3[%6, %c0_2] : memref<128x128xbf16, #tpu.memory_space<vmem>>, vector<128x128xbf16>
    %cst = arith.constant dense<0.000000e+00> : vector<128x128xf32>
    %8 = tpu.matmul %5, %7, %cst {dimension_numbers = #tpu.dot_dimension_numbers<[1], [0], [0], [1], [0, 0, 1, 1], [], []>} : vector<128x128xbf16>, vector<128x128xbf16>, vector<128x128xf32> -> vector<128x128xf32>
    %c0_i32_3 = arith.constant 0 : i32
    %9 = arith.cmpi eq, %arg1, %c0_i32_3 : i32
    %true = arith.constant true
    %10 = arith.xori %9, %true : i1
    %11 = arith.extui %10 : i1 to i32
    %c0_i32_4 = arith.constant 0 : i32
    %12 = arith.cmpi ne, %11, %c0_i32_4 : i32
    scf.if %12 {
      %c0_6 = arith.constant 0 : index
      %c0_7 = arith.constant 0 : index
      %15 = vector.load %arg6[%c0_6, %c0_7] : memref<128x128xf32, #tpu.memory_space<vmem>>, vector<128x128xf32>
      %16 = arith.addf %15, %8 : vector<128x128xf32>
      %c0_8 = arith.constant 0 : index
      %c0_9 = arith.constant 0 : index
      %17 = vector.load %arg6[%c0_8, %c0_9] : memref<128x128xf32, #tpu.memory_space<vmem>>, vector<128x128xf32>
      tpu.vector_store %arg6[%c0_8, %c0_9], %16 {strides = array<i32>} : memref<128x128xf32, #tpu.memory_space<vmem>>, vector<128x128xf32>,
    } else {
    }
    %13 = arith.extui %9 : i1 to i32
    %c0_i32_5 = arith.constant 0 : i32
    %14 = arith.cmpi ne, %13, %c0_i32_5 : i32
    scf.if %14 {
      %c0_6 = arith.constant 0 : index
      %c0_7 = arith.constant 0 : index
      %15 = vector.load %arg6[%c0_6, %c0_7] : memref<128x128xf32, #tpu.memory_space<vmem>>, vector<128x128xf32>
      %16 = arith.addf %15, %8 : vector<128x128xf32>
      %c0_8 = arith.constant 0 : index
      %c0_9 = arith.constant 0 : index
      %17 = vector.load %arg4[%c0_8, %c0_9] : memref<1x128xf32, #tpu.memory_space<vmem>>, vector<1x128xf32>
      %18 = vector.broadcast %17 : vector<1x128xf32> to vector<128x128xf32>
      %19 = arith.addf %16, %18 : vector<128x128xf32>
      %cst_10 = arith.constant 0.000000e+00 : f32
      %20 = vector.broadcast %cst_10 : f32 to vector<128x128xf32>
      %21 = arith.maximumf %19, %20 : vector<128x128xf32>
      %22 = tpu.iota {dimensions = array<i32: 0>} : vector<128x128xi32>
      %c128_i32_11 = arith.constant 128 : i32
      %23 = arith.muli %arg0, %c128_i32_11 : i32
      %24 = vector.broadcast %23 : i32 to vector<128x128xi32>
      %25 = arith.addi %22, %24 : vector<128x128xi32>
      %c16_i32 = arith.constant 16 : i32
      %26 = vector.broadcast %c16_i32 : i32 to vector<128x128xi32>
      %27 = arith.cmpi slt, %25, %26 : vector<128x128xi32>
      %cst_12 = arith.constant 0.000000e+00 : f32
      %28 = vector.broadcast %cst_12 : f32 to vector<128x128xf32>
      %29 = arith.select %27, %21, %28 : vector<128x128xi1>, vector<128x128xf32>
      %cst_13 = arith.constant dense<0.000000e+00> : vector<128xf32>
      %30 = vector.multi_reduction <add>, %29, %cst_13 [0] : vector<128x128xf32> to vector<128xf32>
      %31 = vector.shape_cast %30 : vector<128xf32> to vector<1x128xf32>
      %32 = vector.shape_cast %31 : vector<1x128xf32> to vector<1x128xf32>
      %33 = vector.broadcast %32 : vector<1x128xf32> to vector<8x128xf32>
      %c0_14 = arith.constant 0 : index
      %c0_15 = arith.constant 0 : index
      %34 = vector.load %arg5[%c0_14, %c0_15] : memref<8x128xf32, #tpu.memory_space<vmem>>, vector<8x128xf32>
      tpu.vector_store %arg5[%c0_14, %c0_15], %33 {strides = array<i32>} : memref<8x128xf32, #tpu.memory_space<vmem>>, vector<8x128xf32>,
    } else {
    }
    return
  }
  func.func @transform_0(%arg0: i32, %arg1: i32) -> (i32, i32) {
    %c0_i32 = arith.constant 0 : i32
    return %arg0, %arg1 : i32, i32
  }
  func.func @transform_1(%arg0: i32, %arg1: i32) -> (i32, i32) {
    %c0_i32 = arith.constant 0 : i32
    %c0_i32_0 = arith.constant 0 : i32
    %c0_i32_1 = arith.constant 0 : i32
    return %c0_i32, %c0_i32_0 : i32, i32
  }
  func.func @transform_2(%arg0: i32, %arg1: i32) -> (i32, i32) {
    %c0_i32 = arith.constant 0 : i32
    %c0_i32_0 = arith.constant 0 : i32
    %c0_i32_1 = arith.constant 0 : i32
    return %c0_i32, %c0_i32_0 : i32, i32
  }
  func.func @transform_3(%arg0: i32, %arg1: i32) -> (i32, i32) {
    %c0_i32 = arith.constant 0 : i32
    %c0_i32_0 = arith.constant 0 : i32
    return %arg0, %c0_i32 : i32, i32
  }
}

</mosaic_0001>

<llo_original>
// kernel: gnn_forward.2
$region0: #{gnn_forward.2}
  #allocation0 [shape = 'u32[]', space=smem, size = 0x4, offset = 0x4, fixed_abs, tag = 'smem constant byte address 0x4 - core index']
  #allocation1 [shape = 'u32[144,128]{1,0:T(1,128)}', space=vmem, size = 0x12000, scoped, tag = 'internal scratch']
  #allocation2 [shape = 'f32[128,128]{1,0:T(8,128)}', space=vmem, size = 0x10000, scoped, tag = 'scratch operand']
  %s0 = inlined_call_operand.vmem [shape: bf16[128,128], index: 0, kind: input, shape index: {}]
  %s1 = inlined_call_operand.vmem [shape: bf16[128,128], index: 1, kind: input, shape index: {}]
  %s2 = inlined_call_operand.vmem [shape: bf16[128,128], index: 2, kind: input, shape index: {}]
  %s3 = inlined_call_operand.vmem [shape: f32[1,128], index: 3, kind: input, shape index: {}]
  %s4 = inlined_call_operand.vmem [shape: bf16[128,128], index: 4, kind: output, shape index: {}]
  %s5 = sld [smem:[#allocation0]]
  $region38: #{gnn_forward.2} parent=0
    _
  %s7 = ssub.s32 1, %s5
  %s8 = scalar_select 0, %s7, %s5
  // Predicated region
  $region2: #{gnn_forward.2} parent=0 // pred_check
    _
  $region3: #{gnn_forward.2} parent=0 // pred_check_branch
    %10 = sbr.rel (0) target = $region5
  $region4: #{gnn_forward.2} parent=0 // pred_region
    _
  $region5: #{gnn_forward.2} parent=0 // pred_fallthru
    _
  // Predicated region
  $region6: #{gnn_forward.2} parent=0 // pred_check
    _
  $region7: #{gnn_forward.2} parent=0 // pred_check_branch
    %12 = sbr.rel (0) target = $region9
  $region8: #{gnn_forward.2} parent=0 // pred_region
    _
  $region9: #{gnn_forward.2} parent=0 // pred_fallthru
    _
  // Predicated region
  $region10: #{gnn_forward.2} parent=0 // pred_check
    _
  $region11: #{gnn_forward.2} parent=0 // pred_check_branch
    %14 = sbr.rel (0) target = $region13
  $region12: #{gnn_forward.2} parent=0 // pred_region
    _
  $region13: #{gnn_forward.2} parent=0 // pred_fallthru
    _
  // Predicated region
  $region14: #{gnn_forward.2} parent=0 // pred_check
    _
  $region15: #{gnn_forward.2} parent=0 // pred_check_branch
    %16 = sbr.rel (0) target = $region17
  $region16: #{gnn_forward.2} parent=0 // pred_region
    _
  $region17: #{gnn_forward.2} parent=0 // pred_fallthru
    _
  %p18 = scmp.eq.s32.totalorder 0, 0
  // Predicated region
  $region18: #{gnn_forward.2} parent=0 // pred_check
    %p19 = pneg %p18
  $region19: #{gnn_forward.2} parent=0 // pred_check_branch
    %21 = sbr.rel (%p19) target = $region21
  $region20: #{gnn_forward.2} parent=0 // pred_region
    %22 = vst [vmem:[#allocation2] sm:$0xff] 0.0
    %23 = vst [vmem:[#allocation2 + $0x8] sm:$0xff] 0.0
    %24 = vst [vmem:[#allocation2 + $0x10] sm:$0xff] 0.0
    %25 = vst [vmem:[#allocation2 + $0x18] sm:$0xff] 0.0
    %26 = vst [vmem:[#allocation2 + $0x20] sm:$0xff] 0.0
    %27 = vst [vmem:[#allocation2 + $0x28] sm:$0xff] 0.0
    %28 = vst [vmem:[#allocation2 + $0x30] sm:$0xff] 0.0
    %29 = vst [vmem:[#allocation2 + $0x38] sm:$0xff] 0.0
    %30 = vst [vmem:[#allocation2 + $0x40] sm:$0xff] 0.0
    %31 = vst [vmem:[#allocation2 + $0x48] sm:$0xff] 0.0
    %32 = vst [vmem:[#allocation2 + $0x50] sm:$0xff] 0.0
    %33 = vst [vmem:[#allocation2 + $0x58] sm:$0xff] 0.0
    %34 = vst [vmem:[#allocation2 + $0x60] sm:$0xff] 0.0
    %35 = vst [vmem:[#allocation2 + $0x68] sm:$0xff] 0.0
    %36 = vst [vmem:[#allocation2 + $0x70] sm:$0xff] 0.0
    %37 = vst [vmem:[#allocation2 + $0x78] sm:$0xff] 0.0
  $region21: #{gnn_forward.2} parent=0 // pred_fallthru
    _
  %s38 = smul.u32 0, 128
  %v39 = vld [vmem:[%s0] sm:$0xf]
  %v40 = vld [vmem:[%s0 + $0x4] sm:$0xf]
  %v41 = vld [vmem:[%s0 + $0x8] sm:$0xf]
  %v42 = vld [vmem:[%s0 + $0xc] sm:$0xf]
  %v43 = vld [vmem:[%s0 + $0x10] sm:$0xf]
  %v44 = vld [vmem:[%s0 + $0x14] sm:$0xf]
  %v45 = vld [vmem:[%s0 + $0x18] sm:$0xf]
  %v46 = vld [vmem:[%s0 + $0x1c] sm:$0xf]
  %v47 = vld [vmem:[%s0 + $0x20] sm:$0xf]
  %v48 = vld [vmem:[%s0 + $0x24] sm:$0xf]
  %v49 = vld [vmem:[%s0 + $0x28] sm:$0xf]
  %v50 = vld [vmem:[%s0 + $0x2c] sm:$0xf]
  %v51 = vld [vmem:[%s0 + $0x30] sm:$0xf]
  %v52 = vld [vmem:[%s0 + $0x34] sm:$0xf]
  %v53 = vld [vmem:[%s0 + $0x38] sm:$0xf]
  %v54 = vld [vmem:[%s0 + $0x3c] sm:$0xf]
  %s55 = sshra.s32 %s38, 3
  %s56 = sand.u32 %s38, 7
  %s57 = smul.addr %s55, 4
  %s58 = scalar_lea.vmem %s1, %s57
  %v59 = vld [vmem:[%s58] sm:$0xf]
  %v60 = vld [vmem:[%s58 + $0x4] sm:$0xf]
  %v61 = vld [vmem:[%s58 + $0x8] sm:$0xf]
  %v62 = vld [vmem:[%s58 + $0xc] sm:$0xf]
  %v63 = vld [vmem:[%s58 + $0x10] sm:$0xf]
  %v64 = vld [vmem:[%s58 + $0x14] sm:$0xf]
  %v65 = vld [vmem:[%s58 + $0x18] sm:$0xf]
  %v66 = vld [vmem:[%s58 + $0x1c] sm:$0xf]
  %v67 = vld [vmem:[%s58 + $0x20] sm:$0xf]
  %v68 = vld [vmem:[%s58 + $0x24] sm:$0xf]
  %v69 = vld [vmem:[%s58 + $0x28] sm:$0xf]
  %v70 = vld [vmem:[%s58 + $0x2c] sm:$0xf]
  %v71 = vld [vmem:[%s58 + $0x30] sm:$0xf]
  %v72 = vld [vmem:[%s58 + $0x34] sm:$0xf]
  %v73 = vld [vmem:[%s58 + $0x38] sm:$0xf]
  %v74 = vld [vmem:[%s58 + $0x3c] sm:$0xf]
  %v91 = vunpack.c.l.b16 %v39
  %v92 = vunpack.c.l.b16 %v40
  %v93 = vunpack.c.l.b16 %v41
  %v94 = vunpack.c.l.b16 %v42
  %v95 = vunpack.c.l.b16 %v43
  %v96 = vunpack.c.l.b16 %v44
  %v97 = vunpack.c.l.b16 %v45
  %v98 = vunpack.c.l.b16 %v46
  %v99 = vunpack.c.l.b16 %v47
  %v100 = vunpack.c.l.b16 %v48
  %v101 = vunpack.c.l.b16 %v49
  %v102 = vunpack.c.l.b16 %v50
  %v103 = vunpack.c.l.b16 %v51
  %v104 = vunpack.c.l.b16 %v52
  %v105 = vunpack.c.l.b16 %v53
  %v106 = vunpack.c.l.b16 %v54
  %v107 = vpack.c.b16 %v92, %v91
  %v108 = vpack.c.b16 %v94, %v93
  %v109 = vpack.c.b16 %v96, %v95
  %v110 = vpack.c.b16 %v98, %v97
  %v111 = vpack.c.b16 %v100, %v99
  %v112 = vpack.c.b16 %v102, %v101
  %v113 = vpack.c.b16 %v104, %v103
  %v114 = vpack.c.b16 %v106, %v105
  %v139 = vunpack.c.l.b16 %v59
  %v140 = vunpack.c.l.b16 %v60
  %v141 = vunpack.c.l.b16 %v61
  %v142 = vunpack.c.l.b16 %v62
  %v143 = vunpack.c.l.b16 %v63
  %v144 = vunpack.c.l.b16 %v64
  %v145 = vunpack.c.l.b16 %v65
  %v146 = vunpack.c.l.b16 %v66
  %v147 = vunpack.c.l.b16 %v67
  %v148 = vunpack.c.l.b16 %v68
  %v149 = vunpack.c.l.b16 %v69
  %v150 = vunpack.c.l.b16 %v70
  %v151 = vunpack.c.l.b16 %v71
  %v152 = vunpack.c.l.b16 %v72
  %v153 = vunpack.c.l.b16 %v73
  %v154 = vunpack.c.l.b16 %v74
  %v155 = vpack.c.b16 %v140, %v139
  %v156 = vpack.c.b16 %v142, %v141
  %v157 = vpack.c.b16 %v144, %v143
  %v158 = vpack.c.b16 %v146, %v145
  %v159 = vpack.c.b16 %v148, %v147
  %v160 = vpack.c.b16 %v150, %v149
  %v161 = vpack.c.b16 %v152, %v151
  %v162 = vpack.c.b16 %v154, %v153
  %171 = vmatprep.subr.bf16.mxu0 0
  %172 = vmatpush1.bf16.msra.mxu0 %v155
  %173 = vmatprep.subr.bf16.mxu0 0
  %174 = vmatpush1.bf16.msra.mxu0 %v156
  %175 = vmatprep.subr.bf16.mxu0 0
  %176 = vmatpush1.bf16.msra.mxu0 %v157
  %177 = vmatprep.subr.bf16.mxu0 0
  %178 = vmatpush1.bf16.msra.mxu0 %v158
  %179 = vmatprep.subr.bf16.mxu0 0
  %180 = vmatpush1.bf16.msra.mxu0 %v159
  %181 = vmatprep.subr.bf16.mxu0 0
  %182 = vmatpush1.bf16.msra.mxu0 %v160
  %183 = vmatprep.subr.bf16.mxu0 0
  %184 = vmatpush1.bf16.msra.mxu0 %v161
  %185 = vmatprep.subr.bf16.mxu0 0
  %186 = vmatpush1.bf16.msra.mxu0 %v162
  %187 = vmatprep.subr.bf16.mxu0 0
  %188 = vmatpush1.bf16.msra.mxu0 0
  %189 = vmatprep.subr.bf16.mxu0 0
  %190 = vmatpush1.bf16.msra.mxu0 0
  %191 = vmatprep.subr.bf16.mxu0 0
  %192 = vmatpush1.bf16.msra.mxu0 0
  %193 = vmatprep.subr.bf16.mxu0 0
  %194 = vmatpush1.bf16.msra.mxu0 0
  %195 = vmatprep.subr.bf16.mxu0 0
  %196 = vmatpush1.bf16.msra.mxu0 0
  %197 = vmatprep.subr.bf16.mxu0 0
  %198 = vmatpush1.bf16.msra.mxu0 0
  %199 = vmatprep.subr.bf16.mxu0 0
  %200 = vmatpush1.bf16.msra.mxu0 0
  %201 = vmatprep.subr.bf16.mxu0 0
  %202 = vmatpush1.bf16.msra.mxu0 0
  %203 = vmatprep.mubr.bf16.mxu0 0
  %204 = vmatmul.mubr.bf16.gmra.mrb[0].mxu0 %v107
  %v205 = vpop.f32.mrb[0].mxu0
  %v206 = vadd.f32 0.0, %v205
  %v207 = vpop.f32.mrb[0].mxu0
  %v208 = vpop.f32.mrb[0].mxu0
  %v209 = vadd.f32 0.0, %v208
  %v210 = vpop.f32.mrb[0].mxu0
  %211 = vmatprep.mubr.bf16.mxu0 0
  %212 = vmatmul.mubr.bf16.gmra.mrb[0].mxu0 %v108
  %v213 = vpop.f32.mrb[0].mxu0
  %v214 = vadd.f32 0.0, %v213
  %v215 = vpop.f32.mrb[0].mxu0
  %v216 = vpop.f32.mrb[0].mxu0
  %v217 = vadd.f32 0.0, %v216
  %v218 = vpop.f32.mrb[0].mxu0
  %219 = vmatprep.mubr.bf16.mxu0 0
  %220 = vmatmul.mubr.bf16.gmra.mrb[0].mxu0 %v109
  %v221 = vpop.f32.mrb[0].mxu0
  %v222 = vadd.f32 0.0, %v221
  %v223 = vpop.f32.mrb[0].mxu0
  %v224 = vpop.f32.mrb[0].mxu0
  %v225 = vadd.f32 0.0, %v224
  %v226 = vpop.f32.mrb[0].mxu0
  %227 = vmatprep.mubr.bf16.mxu0 0
  %228 = vmatmul.mubr.bf16.gmra.mrb[0].mxu0 %v110
  %v229 = vpop.f32.mrb[0].mxu0
  %v230 = vadd.f32 0.0, %v229
  %v231 = vpop.f32.mrb[0].mxu0
  %v232 = vpop.f32.mrb[0].mxu0
  %v233 = vadd.f32 0.0, %v232
  %v234 = vpop.f32.mrb[0].mxu0
  %235 = vmatprep.mubr.bf16.mxu0 0
  %236 = vmatmul.mubr.bf16.gmra.mrb[0].mxu0 %v111
  %v237 = vpop.f32.mrb[0].mxu0
  %v238 = vadd.f32 0.0, %v237
  %v239 = vpop.f32.mrb[0].mxu0
  %v240 = vpop.f32.mrb[0].mxu0
  %v241 = vadd.f32 0.0, %v240
  %v242 = vpop.f32.mrb[0].mxu0
  %243 = vmatprep.mubr.bf16.mxu0 0
  %244 = vmatmul.mubr.bf16.gmra.mrb[0].mxu0 %v112
  %v245 = vpop.f32.mrb[0].mxu0
  %v246 = vadd.f32 0.0, %v245
  %v247 = vpop.f32.mrb[0].mxu0
  %v248 = vpop.f32.mrb[0].mxu0
  %v249 = vadd.f32 0.0, %v248
  %v250 = vpop.f32.mrb[0].mxu0
  %251 = vmatprep.mubr.bf16.mxu0 0
  %252 = vmatmul.mubr.bf16.gmra.mrb[0].mxu0 %v113
  %v253 = vpop.f32.mrb[0].mxu0
  %v254 = vadd.f32 0.0, %v253
  %v255 = vpop.f32.mrb[0].mxu0
  %v256 = vpop.f32.mrb[0].mxu0
  %v257 = vadd.f32 0.0, %v256
  %v258 = vpop.f32.mrb[0].mxu0
  %259 = vmatprep.mubr.bf16.mxu0 0
  %260 = vmatmul.mubr.bf16.gmra.mrb[0].mxu0 %v114
  %v261 = vpop.f32.mrb[0].mxu0
  %v262 = vadd.f32 0.0, %v261
  %v263 = vpop.f32.mrb[0].mxu0
  %v264 = vpop.f32.mrb[0].mxu0
  %v265 = vadd.f32 0.0, %v264
  %v266 = vpop.f32.mrb[0].mxu0
  %267 = vdwg.mxu0
  %p268 = scmp.ne.s32.totalorder 0, 0
  // Predicated region
  $region22: #{gnn_forward.2} parent=0 // pred_check
    %p269 = pneg %p268
  $region23: #{gnn_forward.2} parent=0 // pred_check_branch
    %271 = sbr.rel (%p269) target = $region25
  $region24: #{gnn_forward.2} parent=0 // pred_region
    %v272 = vld [vmem:[#allocation2] sm:$0xff]
    %v273 = vld [vmem:[#allocation2 + $0x8] sm:$0xff]
    %v274 = vld [vmem:[#allocation2 + $0x10] sm:$0xff]
    %v275 = vld [vmem:[#allocation2 + $0x18] sm:$0xff]
    %v276 = vld [vmem:[#allocation2 + $0x20] sm:$0xff]
    %v277 = vld [vmem:[#allocation2 + $0x28] sm:$0xff]
    %v278 = vld [vmem:[#allocation2 + $0x30] sm:$0xff]
    %v279 = vld [vmem:[#allocation2 + $0x38] sm:$0xff]
    %v280 = vld [vmem:[#allocation2 + $0x40] sm:$0xff]
    %v281 = vld [vmem:[#allocation2 + $0x48] sm:$0xff]
    %v282 = vld [vmem:[#allocation2 + $0x50] sm:$0xff]
    %v283 = vld [vmem:[#allocation2 + $0x58] sm:$0xff]
    %v284 = vld [vmem:[#allocation2 + $0x60] sm:$0xff]
    %v285 = vld [vmem:[#allocation2 + $0x68] sm:$0xff]
    %v286 = vld [vmem:[#allocation2 + $0x70] sm:$0xff]
    %v287 = vld [vmem:[#allocation2 + $0x78] sm:$0xff]
    %v288 = vadd.f32 %v272, %v206
    %v289 = vadd.f32 %v273, %v209
    %v290 = vadd.f32 %v274, %v214
    %v291 = vadd.f32 %v275, %v217
    %v292 = vadd.f32 %v276, %v222
    %v293 = vadd.f32 %v277, %v225
    %v294 = vadd.f32 %v278, %v230
    %v295 = vadd.f32 %v279, %v233
    %v296 = vadd.f32 %v280, %v238
    %v297 = vadd.f32 %v281, %v241
    %v298 = vadd.f32 %v282, %v246
    %v299 = vadd.f32 %v283, %v249
    %v300 = vadd.f32 %v284, %v254
    %v301 = vadd.f32 %v285, %v257
    %v302 = vadd.f32 %v286, %v262
    %v303 = vadd.f32 %v287, %v265
    %304 = vst [vmem:[#allocation2] sm:$0xff] %v288
    %305 = vst [vmem:[#allocation2 + $0x8] sm:$0xff] %v289
    %306 = vst [vmem:[#allocation2 + $0x10] sm:$0xff] %v290
    %307 = vst [vmem:[#allocation2 + $0x18] sm:$0xff] %v291
    %308 = vst [vmem:[#allocation2 + $0x20] sm:$0xff] %v292
    %309 = vst [vmem:[#allocation2 + $0x28] sm:$0xff] %v293
    %310 = vst [vmem:[#allocation2 + $0x30] sm:$0xff] %v294
    %311 = vst [vmem:[#allocation2 + $0x38] sm:$0xff] %v295
    %312 = vst [vmem:[#allocation2 + $0x40] sm:$0xff] %v296
    %313 = vst [vmem:[#allocation2 + $0x48] sm:$0xff] %v297
    %314 = vst [vmem:[#allocation2 + $0x50] sm:$0xff] %v298
    %315 = vst [vmem:[#allocation2 + $0x58] sm:$0xff] %v299
    %316 = vst [vmem:[#allocation2 + $0x60] sm:$0xff] %v300
    %317 = vst [vmem:[#allocation2 + $0x68] sm:$0xff] %v301
    %318 = vst [vmem:[#allocation2 + $0x70] sm:$0xff] %v302
    %319 = vst [vmem:[#allocation2 + $0x78] sm:$0xff] %v303
  $region25: #{gnn_forward.2} parent=0 // pred_fallthru
    _
  // Predicated region
  $region26: #{gnn_forward.2} parent=0 // pred_check
    %p320 = pneg %p18
  $region27: #{gnn_forward.2} parent=0 // pred_check_branch
    %322 = sbr.rel (%p320) target = $region29
  $region28: #{gnn_forward.2} parent=0 // pred_region
    %v323 = vld [vmem:[#allocation2] sm:$0xff]
    %v324 = vld [vmem:[#allocation2 + $0x8] sm:$0xff]
    %v325 = vld [vmem:[#allocation2 + $0x10] sm:$0xff]
    %v326 = vld [vmem:[#allocation2 + $0x18] sm:$0xff]
    %v327 = vld [vmem:[#allocation2 + $0x20] sm:$0xff]
    %v328 = vld [vmem:[#allocation2 + $0x28] sm:$0xff]
    %v329 = vld [vmem:[#allocation2 + $0x30] sm:$0xff]
    %v330 = vld [vmem:[#allocation2 + $0x38] sm:$0xff]
    %v331 = vld [vmem:[#allocation2 + $0x40] sm:$0xff]
    %v332 = vld [vmem:[#allocation2 + $0x48] sm:$0xff]
    %v333 = vld [vmem:[#allocation2 + $0x50] sm:$0xff]
    %v334 = vld [vmem:[#allocation2 + $0x58] sm:$0xff]
    %v335 = vld [vmem:[#allocation2 + $0x60] sm:$0xff]
    %v336 = vld [vmem:[#allocation2 + $0x68] sm:$0xff]
    %v337 = vld [vmem:[#allocation2 + $0x70] sm:$0xff]
    %v338 = vld [vmem:[#allocation2 + $0x78] sm:$0xff]
    %v339 = vadd.f32 %v323, %v206
    %v340 = vadd.f32 %v324, %v209
    %v341 = vadd.f32 %v325, %v214
    %v342 = vadd.f32 %v326, %v217
    %v343 = vadd.f32 %v327, %v222
    %v344 = vadd.f32 %v328, %v225
    %v345 = vadd.f32 %v329, %v230
    %v346 = vadd.f32 %v330, %v233
    %v347 = vadd.f32 %v331, %v238
    %v348 = vadd.f32 %v332, %v241
    %v349 = vadd.f32 %v333, %v246
    %v350 = vadd.f32 %v334, %v249
    %v351 = vadd.f32 %v335, %v254
    %v352 = vadd.f32 %v336, %v257
    %v353 = vadd.f32 %v337, %v262
    %v354 = vadd.f32 %v338, %v265
    %v355 = vld [vmem:[%s3] sm:$0x1]
    %v357 = vlaneseq
    %v358 = vshrl.u32 %v357, 7
    %v359 = vsub.s32 0, %v358
    %v360 = vrot.slane %v355, %v359
    %v362 = vadd.f32 %v339, %v360
    %v363 = vadd.f32 %v340, %v360
    %v364 = vadd.f32 %v341, %v360
    %v365 = vadd.f32 %v342, %v360
    %v366 = vadd.f32 %v343, %v360
    %v367 = vadd.f32 %v344, %v360
    %v368 = vadd.f32 %v345, %v360
    %v369 = vadd.f32 %v346, %v360
    %v370 = vadd.f32 %v347, %v360
    %v371 = vadd.f32 %v348, %v360
    %v372 = vadd.f32 %v349, %v360
    %v373 = vadd.f32 %v350, %v360
    %v374 = vadd.f32 %v351, %v360
    %v375 = vadd.f32 %v352, %v360
    %v376 = vadd.f32 %v353, %v360
    %v377 = vadd.f32 %v354, %v360
    %v378 = vmax.f32 %v362, 0.0
    %v379 = vmax.f32 %v363, 0.0
    %v380 = vmax.f32 %v364, 0.0
    %v381 = vmax.f32 %v365, 0.0
    %v382 = vmax.f32 %v366, 0.0
    %v383 = vmax.f32 %v367, 0.0
    %v384 = vmax.f32 %v368, 0.0
    %v385 = vmax.f32 %v369, 0.0
    %v386 = vmax.f32 %v370, 0.0
    %v387 = vmax.f32 %v371, 0.0
    %v388 = vmax.f32 %v372, 0.0
    %v389 = vmax.f32 %v373, 0.0
    %v390 = vmax.f32 %v374, 0.0
    %v391 = vmax.f32 %v375, 0.0
    %v392 = vmax.f32 %v376, 0.0
    %v393 = vmax.f32 %v377, 0.0
    %v394 = vpack.c.bf16 %v379, %v378
    %v395 = vpack.c.bf16 %v381, %v380
    %v396 = vpack.c.bf16 %v383, %v382
    %v397 = vpack.c.bf16 %v385, %v384
    %v398 = vpack.c.bf16 %v387, %v386
    %v399 = vpack.c.bf16 %v389, %v388
    %v400 = vpack.c.bf16 %v391, %v390
    %v401 = vpack.c.bf16 %v393, %v392
    %v402 = vld [vmem:[%s2] sm:$0xf]
    %v403 = vld [vmem:[%s2 + $0x4] sm:$0xf]
    %v404 = vld [vmem:[%s2 + $0x8] sm:$0xf]
    %v405 = vld [vmem:[%s2 + $0xc] sm:$0xf]
    %v406 = vld [vmem:[%s2 + $0x10] sm:$0xf]
    %v407 = vld [vmem:[%s2 + $0x14] sm:$0xf]
    %v408 = vld [vmem:[%s2 + $0x18] sm:$0xf]
    %v409 = vld [vmem:[%s2 + $0x1c] sm:$0xf]
    %v410 = vld [vmem:[%s2 + $0x20] sm:$0xf]
    %v411 = vld [vmem:[%s2 + $0x24] sm:$0xf]
    %v412 = vld [vmem:[%s2 + $0x28] sm:$0xf]
    %v413 = vld [vmem:[%s2 + $0x2c] sm:$0xf]
    %v414 = vld [vmem:[%s2 + $0x30] sm:$0xf]
    %v415 = vld [vmem:[%s2 + $0x34] sm:$0xf]
    %v416 = vld [vmem:[%s2 + $0x38] sm:$0xf]
    %v417 = vld [vmem:[%s2 + $0x3c] sm:$0xf]
    %v434 = vunpack.c.l.b16 %v402
    %v435 = vunpack.c.l.b16 %v403
    %v436 = vunpack.c.l.b16 %v404
    %v437 = vunpack.c.l.b16 %v405
    %v438 = vunpack.c.l.b16 %v406
    %v439 = vunpack.c.l.b16 %v407
    %v440 = vunpack.c.l.b16 %v408
    %v441 = vunpack.c.l.b16 %v409
    %v442 = vunpack.c.l.b16 %v410
    %v443 = vunpack.c.l.b16 %v411
    %v444 = vunpack.c.l.b16 %v412
    %v445 = vunpack.c.l.b16 %v413
    %v446 = vunpack.c.l.b16 %v414
    %v447 = vunpack.c.l.b16 %v415
    %v448 = vunpack.c.l.b16 %v416
    %v449 = vunpack.c.l.b16 %v417
    %v450 = vpack.c.b16 %v435, %v434
    %v451 = vpack.c.b16 %v437, %v436
    %v452 = vpack.c.b16 %v439, %v438
    %v453 = vpack.c.b16 %v441, %v440
    %v454 = vpack.c.b16 %v443, %v442
    %v455 = vpack.c.b16 %v445, %v444
    %v456 = vpack.c.b16 %v447, %v446
    %v457 = vpack.c.b16 %v449, %v448
    %466 = vmatprep.subr.bf16.mxu0 0
    %467 = vmatpush1.bf16.msra.mxu0 %v450
    %468 = vmatprep.subr.bf16.mxu0 0
    %469 = vmatpush1.bf16.msra.mxu0 %v451
    %470 = vmatprep.subr.bf16.mxu0 0
    %471 = vmatpush1.bf16.msra.mxu0 %v452
    %472 = vmatprep.subr.bf16.mxu0 0
    %473 = vmatpush1.bf16.msra.mxu0 %v453
    %474 = vmatprep.subr.bf16.mxu0 0
    %475 = vmatpush1.bf16.msra.mxu0 %v454
    %476 = vmatprep.subr.bf16.mxu0 0
    %477 = vmatpush1.bf16.msra.mxu0 %v455
    %478 = vmatprep.subr.bf16.mxu0 0
    %479 = vmatpush1.bf16.msra.mxu0 %v456
    %480 = vmatprep.subr.bf16.mxu0 0
    %481 = vmatpush1.bf16.msra.mxu0 %v457
    %482 = vmatprep.subr.bf16.mxu0 0
    %483 = vmatpush1.bf16.msra.mxu0 0
    %484 = vmatprep.subr.bf16.mxu0 0
    %485 = vmatpush1.bf16.msra.mxu0 0
    %486 = vmatprep.subr.bf16.mxu0 0
    %487 = vmatpush1.bf16.msra.mxu0 0
    %488 = vmatprep.subr.bf16.mxu0 0
    %489 = vmatpush1.bf16.msra.mxu0 0
    %490 = vmatprep.subr.bf16.mxu0 0
    %491 = vmatpush1.bf16.msra.mxu0 0
    %492 = vmatprep.subr.bf16.mxu0 0
    %493 = vmatpush1.bf16.msra.mxu0 0
    %494 = vmatprep.subr.bf16.mxu0 0
    %495 = vmatpush1.bf16.msra.mxu0 0
    %496 = vmatprep.subr.bf16.mxu0 0
    %497 = vmatpush1.bf16.msra.mxu0 0
    %498 = vmatprep.mubr.bf16.mxu0 0
    %499 = vmatmul.mubr.bf16.gmra.mrb[0].mxu0 %v394
    %v500 = vpop.f32.mrb[0].mxu0
    %v501 = vadd.f32 0.0, %v500
    %v502 = vpop.f32.mrb[0].mxu0
    %v503 = vpop.f32.mrb[0].mxu0
    %v504 = vadd.f32 0.0, %v503
    %v505 = vpop.f32.mrb[0].mxu0
    %506 = vmatprep.mubr.bf16.mxu0 0
    %507 = vmatmul.mubr.bf16.gmra.mrb[0].mxu0 %v395
    %v508 = vpop.f32.mrb[0].mxu0
    %v509 = vadd.f32 0.0, %v508
    %v510 = vpop.f32.mrb[0].mxu0
    %v511 = vpop.f32.mrb[0].mxu0
    %v512 = vadd.f32 0.0, %v511
    %v513 = vpop.f32.mrb[0].mxu0
    %514 = vmatprep.mubr.bf16.mxu0 0
    %515 = vmatmul.mubr.bf16.gmra.mrb[0].mxu0 %v396
    %v516 = vpop.f32.mrb[0].mxu0
    %v517 = vadd.f32 0.0, %v516
    %v518 = vpop.f32.mrb[0].mxu0
    %v519 = vpop.f32.mrb[0].mxu0
    %v520 = vadd.f32 0.0, %v519
    %v521 = vpop.f32.mrb[0].mxu0
    %522 = vmatprep.mubr.bf16.mxu0 0
    %523 = vmatmul.mubr.bf16.gmra.mrb[0].mxu0 %v397
    %v524 = vpop.f32.mrb[0].mxu0
    %v525 = vadd.f32 0.0, %v524
    %v526 = vpop.f32.mrb[0].mxu0
    %v527 = vpop.f32.mrb[0].mxu0
    %v528 = vadd.f32 0.0, %v527
    %v529 = vpop.f32.mrb[0].mxu0
    %530 = vmatprep.mubr.bf16.mxu0 0
    %531 = vmatmul.mubr.bf16.gmra.mrb[0].mxu0 %v398
    %v532 = vpop.f32.mrb[0].mxu0
    %v533 = vadd.f32 0.0, %v532
    %v534 = vpop.f32.mrb[0].mxu0
    %v535 = vpop.f32.mrb[0].mxu0
    %v536 = vadd.f32 0.0, %v535
    %v537 = vpop.f32.mrb[0].mxu0
    %538 = vmatprep.mubr.bf16.mxu0 0
    %539 = vmatmul.mubr.bf16.gmra.mrb[0].mxu0 %v399
    %v540 = vpop.f32.mrb[0].mxu0
    %v541 = vadd.f32 0.0, %v540
    %v542 = vpop.f32.mrb[0].mxu0
    %v543 = vpop.f32.mrb[0].mxu0
    %v544 = vadd.f32 0.0, %v543
    %v545 = vpop.f32.mrb[0].mxu0
    %546 = vmatprep.mubr.bf16.mxu0 0
    %547 = vmatmul.mubr.bf16.gmra.mrb[0].mxu0 %v400
    %v548 = vpop.f32.mrb[0].mxu0
    %v549 = vadd.f32 0.0, %v548
    %v550 = vpop.f32.mrb[0].mxu0
    %v551 = vpop.f32.mrb[0].mxu0
    %v552 = vadd.f32 0.0, %v551
    %v553 = vpop.f32.mrb[0].mxu0
    %554 = vmatprep.mubr.bf16.mxu0 0
    %555 = vmatmul.mubr.bf16.gmra.mrb[0].mxu0 %v401
    %v556 = vpop.f32.mrb[0].mxu0
    %v557 = vadd.f32 0.0, %v556
    %v558 = vpop.f32.mrb[0].mxu0
    %v559 = vpop.f32.mrb[0].mxu0
    %v560 = vadd.f32 0.0, %v559
    %v561 = vpop.f32.mrb[0].mxu0
    %562 = vdwg.mxu0
    %v563 = vpack.c.bf16 %v504, %v501
    %v564 = vpack.c.bf16 %v512, %v509
    %v565 = vpack.c.bf16 %v520, %v517
    %v566 = vpack.c.bf16 %v528, %v525
    %v567 = vpack.c.bf16 %v536, %v533
    %v568 = vpack.c.bf16 %v544, %v541
    %v569 = vpack.c.bf16 %v552, %v549
    %v570 = vpack.c.bf16 %v560, %v557
    %v579 = vunpack.c.l.b16 %v563
    %v580 = vunpack.c.h.b16 %v563
    %v581 = vunpack.c.l.b16 %v564
    %v582 = vunpack.c.h.b16 %v564
    %v583 = vunpack.c.l.b16 %v565
    %v584 = vunpack.c.h.b16 %v565
    %v585 = vunpack.c.l.b16 %v566
    %v586 = vunpack.c.h.b16 %v566
    %v587 = vunpack.c.l.b16 %v567
    %v588 = vunpack.c.h.b16 %v567
    %v589 = vunpack.c.l.b16 %v568
    %v590 = vunpack.c.h.b16 %v568
    %v591 = vunpack.c.l.b16 %v569
    %v592 = vunpack.c.h.b16 %v569
    %v593 = vunpack.c.l.b16 %v570
    %v594 = vunpack.c.h.b16 %v570
    %v595 = vpack.c.b16 %v579, %v579
    %v596 = vpack.c.b16 %v580, %v580
    %v597 = vpack.c.b16 %v581, %v581
    %v598 = vpack.c.b16 %v582, %v582
    %v599 = vpack.c.b16 %v583, %v583
    %v600 = vpack.c.b16 %v584, %v584
    %v601 = vpack.c.b16 %v585, %v585
    %v602 = vpack.c.b16 %v586, %v586
    %v603 = vpack.c.b16 %v587, %v587
    %v604 = vpack.c.b16 %v588, %v588
    %v605 = vpack.c.b16 %v589, %v589
    %v606 = vpack.c.b16 %v590, %v590
    %v607 = vpack.c.b16 %v591, %v591
    %v608 = vpack.c.b16 %v592, %v592
    %v609 = vpack.c.b16 %v593, %v593
    %v610 = vpack.c.b16 %v594, %v594
    %627 = vst [vmem:[%s4] sm:$0xf] %v595
    %628 = vst [vmem:[%s4 + $0x4] sm:$0xf] %v596
    %629 = vst [vmem:[%s4 + $0x8] sm:$0xf] %v597
    %630 = vst [vmem:[%s4 + $0xc] sm:$0xf] %v598
    %631 = vst [vmem:[%s4 + $0x10] sm:$0xf] %v599
    %632 = vst [vmem:[%s4 + $0x14] sm:$0xf] %v600
    %633 = vst [vmem:[%s4 + $0x18] sm:$0xf] %v601
    %634 = vst [vmem:[%s4 + $0x1c] sm:$0xf] %v602
    %635 = vst [vmem:[%s4 + $0x20] sm:$0xf] %v603
    %636 = vst [vmem:[%s4 + $0x24] sm:$0xf] %v604
    %637 = vst [vmem:[%s4 + $0x28] sm:$0xf] %v605
    %638 = vst [vmem:[%s4 + $0x2c] sm:$0xf] %v606
    %639 = vst [vmem:[%s4 + $0x30] sm:$0xf] %v607
    %640 = vst [vmem:[%s4 + $0x34] sm:$0xf] %v608
    %641 = vst [vmem:[%s4 + $0x38] sm:$0xf] %v609
    %642 = vst [vmem:[%s4 + $0x3c] sm:$0xf] %v610
  $region29: #{gnn_forward.2} parent=0 // pred_fallthru
    _
  // Predicated region
  $region30: #{gnn_forward.2} parent=0 // pred_check
    _
  $region31: #{gnn_forward.2} parent=0 // pred_check_branch
    %644 = sbr.rel (0) target = $region33
  $region32: #{gnn_forward.2} parent=0 // pred_region
    _
  $region33: #{gnn_forward.2} parent=0 // pred_fallthru
    _
  // Predicated region
  $region34: #{gnn_forward.2} parent=0 // pred_check
    _
  $region35: #{gnn_forward.2} parent=0 // pred_check_branch
    %646 = sbr.rel (0) target = $region37
  $region36: #{gnn_forward.2} parent=0 // pred_region
    _
  $region37: #{gnn_forward.2} parent=0 // pred_fallthru
    _

// kernel: gnn_forward.3
$region0: #{gnn_forward.3}
  #allocation0 [shape = 'u32[]', space=smem, size = 0x4, offset = 0x4, fixed_abs, tag = 'smem constant byte address 0x4 - core index']
  #allocation1 [shape = 'u32[144,128]{1,0:T(1,128)}', space=vmem, size = 0x12000, scoped, tag = 'internal scratch']
  #allocation2 [shape = 'f32[128,128]{1,0:T(8,128)}', space=vmem, size = 0x10000, scoped, tag = 'scratch operand']
  %s0 = inlined_call_operand.vmem [shape: bf16[128,128], index: 0, kind: input, shape index: {}]
  %s1 = inlined_call_operand.vmem [shape: bf16[128,128], index: 1, kind: input, shape index: {}]
  %s2 = inlined_call_operand.vmem [shape: f32[1,128], index: 2, kind: input, shape index: {}]
  %s3 = inlined_call_operand.vmem [shape: f32[8,128], index: 3, kind: output, shape index: {}]
  %s4 = sld [smem:[#allocation0]]
  $region34: #{gnn_forward.3} parent=0
    _
  %s6 = ssub.s32 1, %s4
  %s7 = scalar_select 0, %s6, %s4
  // Predicated region
  $region2: #{gnn_forward.3} parent=0 // pred_check
    _
  $region3: #{gnn_forward.3} parent=0 // pred_check_branch
    %9 = sbr.rel (0) target = $region5
  $region4: #{gnn_forward.3} parent=0 // pred_region
    _
  $region5: #{gnn_forward.3} parent=0 // pred_fallthru
    _
  // Predicated region
  $region6: #{gnn_forward.3} parent=0 // pred_check
    _
  $region7: #{gnn_forward.3} parent=0 // pred_check_branch
    %11 = sbr.rel (0) target = $region9
  $region8: #{gnn_forward.3} parent=0 // pred_region
    _
  $region9: #{gnn_forward.3} parent=0 // pred_fallthru
    _
  // Predicated region
  $region10: #{gnn_forward.3} parent=0 // pred_check
    _
  $region11: #{gnn_forward.3} parent=0 // pred_check_branch
    %13 = sbr.rel (0) target = $region13
  $region12: #{gnn_forward.3} parent=0 // pred_region
    _
  $region13: #{gnn_forward.3} parent=0 // pred_fallthru
    _
  %p15 = scmp.eq.s32.totalorder 0, 0
  // Predicated region
  $region14: #{gnn_forward.3} parent=0 // pred_check
    %p16 = pneg %p15
  $region15: #{gnn_forward.3} parent=0 // pred_check_branch
    %18 = sbr.rel (%p16) target = $region17
  $region16: #{gnn_forward.3} parent=0 // pred_region
    %19 = vst [vmem:[#allocation2] sm:$0xff] 0.0
    %20 = vst [vmem:[#allocation2 + $0x8] sm:$0xff] 0.0
    %21 = vst [vmem:[#allocation2 + $0x10] sm:$0xff] 0.0
    %22 = vst [vmem:[#allocation2 + $0x18] sm:$0xff] 0.0
    %23 = vst [vmem:[#allocation2 + $0x20] sm:$0xff] 0.0
    %24 = vst [vmem:[#allocation2 + $0x28] sm:$0xff] 0.0
    %25 = vst [vmem:[#allocation2 + $0x30] sm:$0xff] 0.0
    %26 = vst [vmem:[#allocation2 + $0x38] sm:$0xff] 0.0
    %27 = vst [vmem:[#allocation2 + $0x40] sm:$0xff] 0.0
    %28 = vst [vmem:[#allocation2 + $0x48] sm:$0xff] 0.0
    %29 = vst [vmem:[#allocation2 + $0x50] sm:$0xff] 0.0
    %30 = vst [vmem:[#allocation2 + $0x58] sm:$0xff] 0.0
    %31 = vst [vmem:[#allocation2 + $0x60] sm:$0xff] 0.0
    %32 = vst [vmem:[#allocation2 + $0x68] sm:$0xff] 0.0
    %33 = vst [vmem:[#allocation2 + $0x70] sm:$0xff] 0.0
    %34 = vst [vmem:[#allocation2 + $0x78] sm:$0xff] 0.0
  $region17: #{gnn_forward.3} parent=0 // pred_fallthru
    _
  %s35 = smul.u32 0, 128
  %v36 = vld [vmem:[%s0] sm:$0xf]
  %v37 = vld [vmem:[%s0 + $0x4] sm:$0xf]
  %v38 = vld [vmem:[%s0 + $0x8] sm:$0xf]
  %v39 = vld [vmem:[%s0 + $0xc] sm:$0xf]
  %v40 = vld [vmem:[%s0 + $0x10] sm:$0xf]
  %v41 = vld [vmem:[%s0 + $0x14] sm:$0xf]
  %v42 = vld [vmem:[%s0 + $0x18] sm:$0xf]
  %v43 = vld [vmem:[%s0 + $0x1c] sm:$0xf]
  %v44 = vld [vmem:[%s0 + $0x20] sm:$0xf]
  %v45 = vld [vmem:[%s0 + $0x24] sm:$0xf]
  %v46 = vld [vmem:[%s0 + $0x28] sm:$0xf]
  %v47 = vld [vmem:[%s0 + $0x2c] sm:$0xf]
  %v48 = vld [vmem:[%s0 + $0x30] sm:$0xf]
  %v49 = vld [vmem:[%s0 + $0x34] sm:$0xf]
  %v50 = vld [vmem:[%s0 + $0x38] sm:$0xf]
  %v51 = vld [vmem:[%s0 + $0x3c] sm:$0xf]
  %s52 = sshra.s32 %s35, 3
  %s53 = sand.u32 %s35, 7
  %s54 = smul.addr %s52, 4
  %s55 = scalar_lea.vmem %s1, %s54
  %v56 = vld [vmem:[%s55] sm:$0xf]
  %v57 = vld [vmem:[%s55 + $0x4] sm:$0xf]
  %v58 = vld [vmem:[%s55 + $0x8] sm:$0xf]
  %v59 = vld [vmem:[%s55 + $0xc] sm:$0xf]
  %v60 = vld [vmem:[%s55 + $0x10] sm:$0xf]
  %v61 = vld [vmem:[%s55 + $0x14] sm:$0xf]
  %v62 = vld [vmem:[%s55 + $0x18] sm:$0xf]
  %v63 = vld [vmem:[%s55 + $0x1c] sm:$0xf]
  %v64 = vld [vmem:[%s55 + $0x20] sm:$0xf]
  %v65 = vld [vmem:[%s55 + $0x24] sm:$0xf]
  %v66 = vld [vmem:[%s55 + $0x28] sm:$0xf]
  %v67 = vld [vmem:[%s55 + $0x2c] sm:$0xf]
  %v68 = vld [vmem:[%s55 + $0x30] sm:$0xf]
  %v69 = vld [vmem:[%s55 + $0x34] sm:$0xf]
  %v70 = vld [vmem:[%s55 + $0x38] sm:$0xf]
  %v71 = vld [vmem:[%s55 + $0x3c] sm:$0xf]
  %v88 = vunpack.c.l.b16 %v36
  %v89 = vunpack.c.l.b16 %v37
  %v90 = vunpack.c.l.b16 %v38
  %v91 = vunpack.c.l.b16 %v39
  %v92 = vunpack.c.l.b16 %v40
  %v93 = vunpack.c.l.b16 %v41
  %v94 = vunpack.c.l.b16 %v42
  %v95 = vunpack.c.l.b16 %v43
  %v96 = vunpack.c.l.b16 %v44
  %v97 = vunpack.c.l.b16 %v45
  %v98 = vunpack.c.l.b16 %v46
  %v99 = vunpack.c.l.b16 %v47
  %v100 = vunpack.c.l.b16 %v48
  %v101 = vunpack.c.l.b16 %v49
  %v102 = vunpack.c.l.b16 %v50
  %v103 = vunpack.c.l.b16 %v51
  %v104 = vpack.c.b16 %v89, %v88
  %v105 = vpack.c.b16 %v91, %v90
  %v106 = vpack.c.b16 %v93, %v92
  %v107 = vpack.c.b16 %v95, %v94
  %v108 = vpack.c.b16 %v97, %v96
  %v109 = vpack.c.b16 %v99, %v98
  %v110 = vpack.c.b16 %v101, %v100
  %v111 = vpack.c.b16 %v103, %v102
  %v136 = vunpack.c.l.b16 %v56
  %v137 = vunpack.c.l.b16 %v57
  %v138 = vunpack.c.l.b16 %v58
  %v139 = vunpack.c.l.b16 %v59
  %v140 = vunpack.c.l.b16 %v60
  %v141 = vunpack.c.l.b16 %v61
  %v142 = vunpack.c.l.b16 %v62
  %v143 = vunpack.c.l.b16 %v63
  %v144 = vunpack.c.l.b16 %v64
  %v145 = vunpack.c.l.b16 %v65
  %v146 = vunpack.c.l.b16 %v66
  %v147 = vunpack.c.l.b16 %v67
  %v148 = vunpack.c.l.b16 %v68
  %v149 = vunpack.c.l.b16 %v69
  %v150 = vunpack.c.l.b16 %v70
  %v151 = vunpack.c.l.b16 %v71
  %v152 = vpack.c.b16 %v137, %v136
  %v153 = vpack.c.b16 %v139, %v138
  %v154 = vpack.c.b16 %v141, %v140
  %v155 = vpack.c.b16 %v143, %v142
  %v156 = vpack.c.b16 %v145, %v144
  %v157 = vpack.c.b16 %v147, %v146
  %v158 = vpack.c.b16 %v149, %v148
  %v159 = vpack.c.b16 %v151, %v150
  %168 = vmatprep.subr.bf16.mxu0 0
  %169 = vmatpush1.bf16.msra.mxu0 %v152
  %170 = vmatprep.subr.bf16.mxu0 0
  %171 = vmatpush1.bf16.msra.mxu0 %v153
  %172 = vmatprep.subr.bf16.mxu0 0
  %173 = vmatpush1.bf16.msra.mxu0 %v154
  %174 = vmatprep.subr.bf16.mxu0 0
  %175 = vmatpush1.bf16.msra.mxu0 %v155
  %176 = vmatprep.subr.bf16.mxu0 0
  %177 = vmatpush1.bf16.msra.mxu0 %v156
  %178 = vmatprep.subr.bf16.mxu0 0
  %179 = vmatpush1.bf16.msra.mxu0 %v157
  %180 = vmatprep.subr.bf16.mxu0 0
  %181 = vmatpush1.bf16.msra.mxu0 %v158
  %182 = vmatprep.subr.bf16.mxu0 0
  %183 = vmatpush1.bf16.msra.mxu0 %v159
  %184 = vmatprep.subr.bf16.mxu0 0
  %185 = vmatpush1.bf16.msra.mxu0 0
  %186 = vmatprep.subr.bf16.mxu0 0
  %187 = vmatpush1.bf16.msra.mxu0 0
  %188 = vmatprep.subr.bf16.mxu0 0
  %189 = vmatpush1.bf16.msra.mxu0 0
  %190 = vmatprep.subr.bf16.mxu0 0
  %191 = vmatpush1.bf16.msra.mxu0 0
  %192 = vmatprep.subr.bf16.mxu0 0
  %193 = vmatpush1.bf16.msra.mxu0 0
  %194 = vmatprep.subr.bf16.mxu0 0
  %195 = vmatpush1.bf16.msra.mxu0 0
  %196 = vmatprep.subr.bf16.mxu0 0
  %197 = vmatpush1.bf16.msra.mxu0 0
  %198 = vmatprep.subr.bf16.mxu0 0
  %199 = vmatpush1.bf16.msra.mxu0 0
  %200 = vmatprep.mubr.bf16.mxu0 0
  %201 = vmatmul.mubr.bf16.gmra.mrb[0].mxu0 %v104
  %v202 = vpop.f32.mrb[0].mxu0
  %v203 = vadd.f32 0.0, %v202
  %v204 = vpop.f32.mrb[0].mxu0
  %v205 = vpop.f32.mrb[0].mxu0
  %v206 = vadd.f32 0.0, %v205
  %v207 = vpop.f32.mrb[0].mxu0
  %208 = vmatprep.mubr.bf16.mxu0 0
  %209 = vmatmul.mubr.bf16.gmra.mrb[0].mxu0 %v105
  %v210 = vpop.f32.mrb[0].mxu0
  %v211 = vadd.f32 0.0, %v210
  %v212 = vpop.f32.mrb[0].mxu0
  %v213 = vpop.f32.mrb[0].mxu0
  %v214 = vadd.f32 0.0, %v213
  %v215 = vpop.f32.mrb[0].mxu0
  %216 = vmatprep.mubr.bf16.mxu0 0
  %217 = vmatmul.mubr.bf16.gmra.mrb[0].mxu0 %v106
  %v218 = vpop.f32.mrb[0].mxu0
  %v219 = vadd.f32 0.0, %v218
  %v220 = vpop.f32.mrb[0].mxu0
  %v221 = vpop.f32.mrb[0].mxu0
  %v222 = vadd.f32 0.0, %v221
  %v223 = vpop.f32.mrb[0].mxu0
  %224 = vmatprep.mubr.bf16.mxu0 0
  %225 = vmatmul.mubr.bf16.gmra.mrb[0].mxu0 %v107
  %v226 = vpop.f32.mrb[0].mxu0
  %v227 = vadd.f32 0.0, %v226
  %v228 = vpop.f32.mrb[0].mxu0
  %v229 = vpop.f32.mrb[0].mxu0
  %v230 = vadd.f32 0.0, %v229
  %v231 = vpop.f32.mrb[0].mxu0
  %232 = vmatprep.mubr.bf16.mxu0 0
  %233 = vmatmul.mubr.bf16.gmra.mrb[0].mxu0 %v108
  %v234 = vpop.f32.mrb[0].mxu0
  %v235 = vadd.f32 0.0, %v234
  %v236 = vpop.f32.mrb[0].mxu0
  %v237 = vpop.f32.mrb[0].mxu0
  %v238 = vadd.f32 0.0, %v237
  %v239 = vpop.f32.mrb[0].mxu0
  %240 = vmatprep.mubr.bf16.mxu0 0
  %241 = vmatmul.mubr.bf16.gmra.mrb[0].mxu0 %v109
  %v242 = vpop.f32.mrb[0].mxu0
  %v243 = vadd.f32 0.0, %v242
  %v244 = vpop.f32.mrb[0].mxu0
  %v245 = vpop.f32.mrb[0].mxu0
  %v246 = vadd.f32 0.0, %v245
  %v247 = vpop.f32.mrb[0].mxu0
  %248 = vmatprep.mubr.bf16.mxu0 0
  %249 = vmatmul.mubr.bf16.gmra.mrb[0].mxu0 %v110
  %v250 = vpop.f32.mrb[0].mxu0
  %v251 = vadd.f32 0.0, %v250
  %v252 = vpop.f32.mrb[0].mxu0
  %v253 = vpop.f32.mrb[0].mxu0
  %v254 = vadd.f32 0.0, %v253
  %v255 = vpop.f32.mrb[0].mxu0
  %256 = vmatprep.mubr.bf16.mxu0 0
  %257 = vmatmul.mubr.bf16.gmra.mrb[0].mxu0 %v111
  %v258 = vpop.f32.mrb[0].mxu0
  %v259 = vadd.f32 0.0, %v258
  %v260 = vpop.f32.mrb[0].mxu0
  %v261 = vpop.f32.mrb[0].mxu0
  %v262 = vadd.f32 0.0, %v261
  %v263 = vpop.f32.mrb[0].mxu0
  %264 = vdwg.mxu0
  %p265 = scmp.ne.s32.totalorder 0, 0
  // Predicated region
  $region18: #{gnn_forward.3} parent=0 // pred_check
    %p266 = pneg %p265
  $region19: #{gnn_forward.3} parent=0 // pred_check_branch
    %268 = sbr.rel (%p266) target = $region21
  $region20: #{gnn_forward.3} parent=0 // pred_region
    %v269 = vld [vmem:[#allocation2] sm:$0xff]
    %v270 = vld [vmem:[#allocation2 + $0x8] sm:$0xff]
    %v271 = vld [vmem:[#allocation2 + $0x10] sm:$0xff]
    %v272 = vld [vmem:[#allocation2 + $0x18] sm:$0xff]
    %v273 = vld [vmem:[#allocation2 + $0x20] sm:$0xff]
    %v274 = vld [vmem:[#allocation2 + $0x28] sm:$0xff]
    %v275 = vld [vmem:[#allocation2 + $0x30] sm:$0xff]
    %v276 = vld [vmem:[#allocation2 + $0x38] sm:$0xff]
    %v277 = vld [vmem:[#allocation2 + $0x40] sm:$0xff]
    %v278 = vld [vmem:[#allocation2 + $0x48] sm:$0xff]
    %v279 = vld [vmem:[#allocation2 + $0x50] sm:$0xff]
    %v280 = vld [vmem:[#allocation2 + $0x58] sm:$0xff]
    %v281 = vld [vmem:[#allocation2 + $0x60] sm:$0xff]
    %v282 = vld [vmem:[#allocation2 + $0x68] sm:$0xff]
    %v283 = vld [vmem:[#allocation2 + $0x70] sm:$0xff]
    %v284 = vld [vmem:[#allocation2 + $0x78] sm:$0xff]
    %v285 = vadd.f32 %v269, %v203
    %v286 = vadd.f32 %v270, %v206
    %v287 = vadd.f32 %v271, %v211
    %v288 = vadd.f32 %v272, %v214
    %v289 = vadd.f32 %v273, %v219
    %v290 = vadd.f32 %v274, %v222
    %v291 = vadd.f32 %v275, %v227
    %v292 = vadd.f32 %v276, %v230
    %v293 = vadd.f32 %v277, %v235
    %v294 = vadd.f32 %v278, %v238
    %v295 = vadd.f32 %v279, %v243
    %v296 = vadd.f32 %v280, %v246
    %v297 = vadd.f32 %v281, %v251
    %v298 = vadd.f32 %v282, %v254
    %v299 = vadd.f32 %v283, %v259
    %v300 = vadd.f32 %v284, %v262
    %301 = vst [vmem:[#allocation2] sm:$0xff] %v285
    %302 = vst [vmem:[#allocation2 + $0x8] sm:$0xff] %v286
    %303 = vst [vmem:[#allocation2 + $0x10] sm:$0xff] %v287
    %304 = vst [vmem:[#allocation2 + $0x18] sm:$0xff] %v288
    %305 = vst [vmem:[#allocation2 + $0x20] sm:$0xff] %v289
    %306 = vst [vmem:[#allocation2 + $0x28] sm:$0xff] %v290
    %307 = vst [vmem:[#allocation2 + $0x30] sm:$0xff] %v291
    %308 = vst [vmem:[#allocation2 + $0x38] sm:$0xff] %v292
    %309 = vst [vmem:[#allocation2 + $0x40] sm:$0xff] %v293
    %310 = vst [vmem:[#allocation2 + $0x48] sm:$0xff] %v294
    %311 = vst [vmem:[#allocation2 + $0x50] sm:$0xff] %v295
    %312 = vst [vmem:[#allocation2 + $0x58] sm:$0xff] %v296
    %313 = vst [vmem:[#allocation2 + $0x60] sm:$0xff] %v297
    %314 = vst [vmem:[#allocation2 + $0x68] sm:$0xff] %v298
    %315 = vst [vmem:[#allocation2 + $0x70] sm:$0xff] %v299
    %316 = vst [vmem:[#allocation2 + $0x78] sm:$0xff] %v300
  $region21: #{gnn_forward.3} parent=0 // pred_fallthru
    _
  // Predicated region
  $region22: #{gnn_forward.3} parent=0 // pred_check
    %p317 = pneg %p15
  $region23: #{gnn_forward.3} parent=0 // pred_check_branch
    %319 = sbr.rel (%p317) target = $region25
  $region24: #{gnn_forward.3} parent=0 // pred_region
    %v320 = vld [vmem:[#allocation2] sm:$0xff]
    %v321 = vld [vmem:[#allocation2 + $0x8] sm:$0xff]
    %v322 = vld [vmem:[#allocation2 + $0x10] sm:$0xff]
    %v323 = vld [vmem:[#allocation2 + $0x18] sm:$0xff]
    %v324 = vld [vmem:[#allocation2 + $0x20] sm:$0xff]
    %v325 = vld [vmem:[#allocation2 + $0x28] sm:$0xff]
    %v326 = vld [vmem:[#allocation2 + $0x30] sm:$0xff]
    %v327 = vld [vmem:[#allocation2 + $0x38] sm:$0xff]
    %v328 = vld [vmem:[#allocation2 + $0x40] sm:$0xff]
    %v329 = vld [vmem:[#allocation2 + $0x48] sm:$0xff]
    %v330 = vld [vmem:[#allocation2 + $0x50] sm:$0xff]
    %v331 = vld [vmem:[#allocation2 + $0x58] sm:$0xff]
    %v332 = vld [vmem:[#allocation2 + $0x60] sm:$0xff]
    %v333 = vld [vmem:[#allocation2 + $0x68] sm:$0xff]
    %v334 = vld [vmem:[#allocation2 + $0x70] sm:$0xff]
    %v335 = vld [vmem:[#allocation2 + $0x78] sm:$0xff]
    %v336 = vadd.f32 %v320, %v203
    %v337 = vadd.f32 %v321, %v206
    %v338 = vadd.f32 %v322, %v211
    %v339 = vadd.f32 %v323, %v214
    %v340 = vadd.f32 %v324, %v219
    %v341 = vadd.f32 %v325, %v222
    %v342 = vadd.f32 %v326, %v227
    %v343 = vadd.f32 %v327, %v230
    %v344 = vadd.f32 %v328, %v235
    %v345 = vadd.f32 %v329, %v238
    %v346 = vadd.f32 %v330, %v243
    %v347 = vadd.f32 %v331, %v246
    %v348 = vadd.f32 %v332, %v251
    %v349 = vadd.f32 %v333, %v254
    %v350 = vadd.f32 %v334, %v259
    %v351 = vadd.f32 %v335, %v262
    %v352 = vld [vmem:[%s2] sm:$0x1]
    %v354 = vlaneseq
    %v355 = vshrl.u32 %v354, 7
    %v356 = vsub.s32 0, %v355
    %v357 = vrot.slane %v352, %v356
    %v359 = vadd.f32 %v336, %v357
    %v360 = vadd.f32 %v337, %v357
    %v361 = vadd.f32 %v338, %v357
    %v362 = vadd.f32 %v339, %v357
    %v363 = vadd.f32 %v340, %v357
    %v364 = vadd.f32 %v341, %v357
    %v365 = vadd.f32 %v342, %v357
    %v366 = vadd.f32 %v343, %v357
    %v367 = vadd.f32 %v344, %v357
    %v368 = vadd.f32 %v345, %v357
    %v369 = vadd.f32 %v346, %v357
    %v370 = vadd.f32 %v347, %v357
    %v371 = vadd.f32 %v348, %v357
    %v372 = vadd.f32 %v349, %v357
    %v373 = vadd.f32 %v350, %v357
    %v374 = vadd.f32 %v351, %v357
    %v375 = vmax.f32 %v359, 0.0
    %v376 = vmax.f32 %v360, 0.0
    %v377 = vmax.f32 %v361, 0.0
    %v378 = vmax.f32 %v362, 0.0
    %v379 = vmax.f32 %v363, 0.0
    %v380 = vmax.f32 %v364, 0.0
    %v381 = vmax.f32 %v365, 0.0
    %v382 = vmax.f32 %v366, 0.0
    %v383 = vmax.f32 %v367, 0.0
    %v384 = vmax.f32 %v368, 0.0
    %v385 = vmax.f32 %v369, 0.0
    %v386 = vmax.f32 %v370, 0.0
    %v387 = vmax.f32 %v371, 0.0
    %v388 = vmax.f32 %v372, 0.0
    %v389 = vmax.f32 %v373, 0.0
    %v390 = vmax.f32 %v374, 0.0
    %v391 = vlaneseq
    %v392 = vshrl.u32 %v391, 7
    %v393 = vadd.s32 %v392, 8
    %v394 = vadd.s32 %v392, 16
    %v395 = vadd.s32 %v392, 24
    %v396 = vadd.s32 %v392, 32
    %v397 = vadd.s32 %v392, 40
    %v398 = vadd.s32 %v392, 48
    %v399 = vadd.s32 %v392, 56
    %v400 = vadd.s32 %v392, 64
    %v401 = vadd.s32 %v392, 72
    %v402 = vadd.s32 %v392, 80
    %v403 = vadd.s32 %v392, 88
    %v404 = vadd.s32 %v392, 96
    %v405 = vadd.s32 %v392, 104
    %v406 = vadd.s32 %v392, 112
    %v407 = vadd.s32 %v392, 120
    %s408 = smul.u32 0, 128
    %v409 = vstv %s408
    %v410 = vadd.s32 %v392, %v409
    %v411 = vadd.s32 %v393, %v409
    %v412 = vadd.s32 %v394, %v409
    %v413 = vadd.s32 %v395, %v409
    %v414 = vadd.s32 %v396, %v409
    %v415 = vadd.s32 %v397, %v409
    %v416 = vadd.s32 %v398, %v409
    %v417 = vadd.s32 %v399, %v409
    %v418 = vadd.s32 %v400, %v409
    %v419 = vadd.s32 %v401, %v409
    %v420 = vadd.s32 %v402, %v409
    %v421 = vadd.s32 %v403, %v409
    %v422 = vadd.s32 %v404, %v409
    %v423 = vadd.s32 %v405, %v409
    %v424 = vadd.s32 %v406, %v409
    %v425 = vadd.s32 %v407, %v409
    %vm426 = vcmp.lt.s32.totalorder %v410, 16
    %vm427 = vcmp.lt.s32.totalorder %v411, 16
    %vm428 = vcmp.lt.s32.totalorder %v412, 16
    %vm429 = vcmp.lt.s32.totalorder %v413, 16
    %vm430 = vcmp.lt.s32.totalorder %v414, 16
    %vm431 = vcmp.lt.s32.totalorder %v415, 16
    %vm432 = vcmp.lt.s32.totalorder %v416, 16
    %vm433 = vcmp.lt.s32.totalorder %v417, 16
    %vm434 = vcmp.lt.s32.totalorder %v418, 16
    %vm435 = vcmp.lt.s32.totalorder %v419, 16
    %vm436 = vcmp.lt.s32.totalorder %v420, 16
    %vm437 = vcmp.lt.s32.totalorder %v421, 16
    %vm438 = vcmp.lt.s32.totalorder %v422, 16
    %vm439 = vcmp.lt.s32.totalorder %v423, 16
    %vm440 = vcmp.lt.s32.totalorder %v424, 16
    %vm441 = vcmp.lt.s32.totalorder %v425, 16
    %v442 = vsel %vm426, %v375, 0.0
    %v443 = vsel %vm427, %v376, 0.0
    %v444 = vsel %vm428, %v377, 0.0
    %v445 = vsel %vm429, %v378, 0.0
    %v446 = vsel %vm430, %v379, 0.0
    %v447 = vsel %vm431, %v380, 0.0
    %v448 = vsel %vm432, %v381, 0.0
    %v449 = vsel %vm433, %v382, 0.0
    %v450 = vsel %vm434, %v383, 0.0
    %v451 = vsel %vm435, %v384, 0.0
    %v452 = vsel %vm436, %v385, 0.0
    %v453 = vsel %vm437, %v386, 0.0
    %v454 = vsel %vm438, %v387, 0.0
    %v455 = vsel %vm439, %v388, 0.0
    %v456 = vsel %vm440, %v389, 0.0
    %v457 = vsel %vm441, %v390, 0.0
    %v458 = vadd.f32 %v442, %v443
    %v459 = vadd.f32 %v458, %v444
    %v460 = vadd.f32 %v459, %v445
    %v461 = vadd.f32 %v460, %v446
    %v462 = vadd.f32 %v461, %v447
    %v463 = vadd.f32 %v462, %v448
    %v464 = vadd.f32 %v463, %v449
    %v465 = vadd.f32 %v464, %v450
    %v466 = vadd.f32 %v465, %v451
    %v467 = vadd.f32 %v466, %v452
    %v468 = vadd.f32 %v467, %v453
    %v469 = vadd.f32 %v468, %v454
    %v470 = vadd.f32 %v469, %v455
    %v471 = vadd.f32 %v470, %v456
    %v472 = vadd.f32 %v471, %v457
    %v473 = vrot.slane %v472, 4
    %v474 = vadd.f32 %v472, %v473
    %v475 = vrot.slane %v474, 2
    %v476 = vadd.f32 %v474, %v475
    %v477 = vrot.slane %v476, 1
    %v478 = vadd.f32 %v476, %v477
    %479 = vst [vmem:[%s3] sm:$0xff] %v478
  $region25: #{gnn_forward.3} parent=0 // pred_fallthru
    _
  // Predicated region
  $region26: #{gnn_forward.3} parent=0 // pred_check
    _
  $region27: #{gnn_forward.3} parent=0 // pred_check_branch
    %481 = sbr.rel (0) target = $region29
  $region28: #{gnn_forward.3} parent=0 // pred_region
    _
  $region29: #{gnn_forward.3} parent=0 // pred_fallthru
    _
  // Predicated region
  $region30: #{gnn_forward.3} parent=0 // pred_check
    _
  $region31: #{gnn_forward.3} parent=0 // pred_check_branch
    %483 = sbr.rel (0) target = $region33
  $region32: #{gnn_forward.3} parent=0 // pred_region
    _
  $region33: #{gnn_forward.3} parent=0 // pred_fallthru
    _

</llo_original>
